<compile_context>
chip_gen: v7x
topology: tpu7x:2x2x1
jax: 0.10.0
libtpu: 0.0.40
codegen_flags: <defaults>
</compile_context>

<pallas_src>
import jax
import jax.numpy as jnp
from jax.experimental import pallas as pl
from jax.experimental.pallas import tpu as pltpu


def _critic_kernel(state_ref, action_ref, w_ref, bias_ref, out_ref):
    """Fused twin-Q forward. One grid point; all operands fully resident in VMEM.

    state_ref  : (B, S)          f32  -- raw state (preprocessor folded into W1)
    action_ref : (B, A)          f32
    w_ref      : (S+A+4H, 2H)    bf16 -- rows: [W1_s; W1_a; W2_blkdiag; W3_blkdiag_pad]
    bias_ref   : (3, 2H)         f32  -- rows: [b1_q1|b1_q2], [b2_q1|b2_q2], [b3_q1,b3_q2,0..]
    out_ref    : (B, 1)          f32  -- min(q1, q2)
    """
    S = state_ref.shape[1]
    A = action_ref.shape[1]
    H2 = w_ref.shape[1]                      # 2 * hidden_dim

    # Static slab slices (compile-time offsets; W2/W3 sections are 16-row aligned).
    w1_s = w_ref[0:S, :]                      # (S,  2H)
    w1_a = w_ref[S:S + A, :]                  # (A,  2H)
    w2 = w_ref[S + A:S + A + H2, :]           # (2H, 2H) block-diagonal
    w3 = w_ref[S + A + H2:S + A + 2 * H2, :]  # (2H, 2H) block-diag, cols 2.. are zero

    b = bias_ref[...]
    b1 = b[0:1, :]
    b2 = b[1:2, :]
    b3 = b[2:3, :]

    s_bf = state_ref[...].astype(jnp.bfloat16)
    a_bf = action_ref[...].astype(jnp.bfloat16)

    # layer 1: two fused-head dots (bf16 MXU operands, f32 accumulation)
    h = (jnp.dot(s_bf, w1_s, preferred_element_type=jnp.float32)
         + jnp.dot(a_bf, w1_a, preferred_element_type=jnp.float32)
         + b1)
    h = jnp.maximum(h, 0.0)                  # ReLU in f32 (v5e VPU has no bf16)

    # layer 2: block-diagonal W2 keeps the two heads independent
    h = jnp.dot(h.astype(jnp.bfloat16), w2, preferred_element_type=jnp.float32) + b2
    h = jnp.maximum(h, 0.0)

    # layer 3: block-diagonal W3 -> columns [q1, q2, 0, ...]
    q = jnp.dot(h.astype(jnp.bfloat16), w3, preferred_element_type=jnp.float32) + b3

    # torch.min(q1, q2) fused into the kernel
    out_ref[...] = jnp.minimum(q[:, 0:1], q[:, 1:2]).astype(out_ref.dtype)


def critic_forward(state, action, packed):
    """state: (B, S) f32, action: (B, A) f32 -> (B, 1) = min(q1, q2). One device op."""
    B, S = state.shape
    A = action.shape[1]
    w = packed["w"]
    bias = packed["bias"]
    H2 = w.shape[1]

    flops = 2 * B * ((S + A) * H2 + H2 * H2 + H2 * H2)
    bytes_accessed = (state.size + action.size + bias.size + B) * 4 + w.size * 2

    vmem = pl.BlockSpec(memory_space=pltpu.MemorySpace.VMEM)
    return pl.pallas_call(
        _critic_kernel,
        out_shape=jax.ShapeDtypeStruct((B, 1), jnp.float32),
        in_specs=[vmem] * 4,
        out_specs=vmem,
        cost_estimate=pl.CostEstimate(
            flops=flops, transcendentals=0, bytes_accessed=bytes_accessed),
    )(state, action, w, bias)


# ----------------------------------------------------------------------------- params


def init_params(key, state_dim, action_dim, hidden_dim):
    """Torch-style synthetic parameters (shapes match CriticNetwork.__init__)."""
    def linear(k, fan_in, fan_out):
        kw, kb = jax.random.split(k)
        bound = 1.0 / jnp.sqrt(fan_in)   # PyTorch nn.Linear default init
        w = jax.random.uniform(kw, (fan_in, fan_out), jnp.float32, -bound, bound)
        b = jax.random.uniform(kb, (fan_out,), jnp.float32, -bound, bound)
        return w, b

    input_dim = state_dim + action_dim
    keys = jax.random.split(key, 6)

    def q_params(k1, k2, k3):
        w1, b1 = linear(k1, input_dim, hidden_dim)
        w2, b2 = linear(k2, hidden_dim, hidden_dim)
        w3, b3 = linear(k3, hidden_dim, 1)
        return {"w1": w1, "b1": b1, "w2": w2, "b2": b2, "w3": w3, "b3": b3}

    return {
        "prep": jnp.ones((state_dim,), jnp.float32),  # state_preprocessor (ones, frozen)
        "q1": q_params(keys[0], keys[1], keys[2]),
        "q2": q_params(keys[3], keys[4], keys[5]),
    }


def pack_params(params, state_dim):
    """One-time transform: fold prep into W1, fuse twin heads, pack one bf16 slab.

    Slab rows (width 2H):
      [0, S)            W1 state rows (preprocessor folded in)
      [S, S+A)          W1 action rows
      [S+A, S+A+2H)     W2 as block-diag(W2_q1, W2_q2)
      [S+A+2H, S+A+4H)  W3 as block-diag, padded to 2H columns (cols 0/1 are the heads)
    """
    prep = params["prep"]
    q1, q2 = params["q1"], params["q2"]
    H = q1["b1"].shape[0]
    in_dim = q1["w1"].shape[0]
    action_dim = in_dim - state_dim
    H2 = 2 * H

    # fold diag([prep, 1s]) into W1's rows:  (s*prep) @ W1 == s @ (diag(prep) @ W1)
    scale = jnp.concatenate([prep, jnp.ones((action_dim,), jnp.float32)])
    w1 = jnp.concatenate([q1["w1"] * scale[:, None],
                          q2["w1"] * scale[:, None]], axis=1)            # (S+A, 2H)

    zH = jnp.zeros((H, H), jnp.float32)
    w2 = jnp.block([[q1["w2"], zH], [zH, q2["w2"]]])                     # (2H, 2H)

    w3 = jnp.zeros((H2, H2), jnp.float32)
    w3 = w3.at[0:H, 0].set(q1["w3"][:, 0]).at[H:H2, 1].set(q2["w3"][:, 0])  # (2H, 2H)

    w = jnp.concatenate([w1, w2, w3], axis=0).astype(jnp.bfloat16)       # (S+A+4H, 2H)

    b1 = jnp.concatenate([q1["b1"], q2["b1"]])                           # (2H,)
    b2 = jnp.concatenate([q1["b2"], q2["b2"]])                           # (2H,)
    b3 = jnp.zeros((H2,), jnp.float32).at[0].set(q1["b3"][0]).at[1].set(q2["b3"][0])
    bias = jnp.stack([b1, b2, b3], axis=0)                               # (3, 2H) f32

    return {"w": w, "bias": bias}


# -------------------------------------------------------------------------- references


def reference_forward_f32(state, action, params):
    """Pure-JAX f32 reference with exact torch semantics."""
    s = state * params["prep"]
    sa = jnp.concatenate([s, action], axis=1)

    def mlp(p):
        h = jnp.maximum(sa @ p["w1"] + p["b1"], 0.0)
        h = jnp.maximum(h @ p["w2"] + p["b2"], 0.0)
        return h @ p["w3"] + p["b3"]                                     # (B, 1)

    return jnp.minimum(mlp(params["q1"]), mlp(params["q2"]))


def reference_forward_packed(state, action, packed, state_dim, action_dim):
    """Pure-JAX reference mirroring the kernel's packed bf16 math exactly."""
    S, A = state_dim, action_dim
    w, b = packed["w"], packed["bias"]
    H2 = w.shape[1]
    s_bf = state.astype(jnp.bfloat16)
    a_bf = action.astype(jnp.bfloat16)
    h = (jnp.dot(s_bf, w[0:S], preferred_element_type=jnp.float32)
         + jnp.dot(a_bf, w[S:S + A], preferred_element_type=jnp.float32) + b[0:1])
    h = jnp.maximum(h, 0.0)
    h = jnp.dot(h.astype(jnp.bfloat16), w[S + A:S + A + H2],
                preferred_element_type=jnp.float32) + b[1:2]
    h = jnp.maximum(h, 0.0)
    q = jnp.dot(h.astype(jnp.bfloat16), w[S + A + H2:S + A + 2 * H2],
                preferred_element_type=jnp.float32) + b[2:3]
    return jnp.minimum(q[:, 0:1], q[:, 1:2])


if __name__ == "__main__":
    B, STATE_DIM, ACTION_DIM, HIDDEN = 8, 12, 4, 32

    key = jax.random.PRNGKey(0)
    k_state, k_action, k_params = jax.random.split(key, 3)

    state = jax.random.normal(k_state, (B, STATE_DIM), jnp.float32)
    action = jax.random.normal(k_action, (B, ACTION_DIM), jnp.float32)
    params = init_params(k_params, STATE_DIM, ACTION_DIM, HIDDEN)
    packed = pack_params(params, STATE_DIM)

    out = critic_forward(state, action, packed)
    out = jax.block_until_ready(out)
    assert out.shape == (B, 1)

    # tight check vs. a reference that mirrors the kernel's bf16-operand math
    ref_packed = reference_forward_packed(state, action, packed, STATE_DIM, ACTION_DIM)
    assert jnp.allclose(out, ref_packed, atol=1e-4, rtol=1e-4)

    # loose check vs. the exact f32 torch-semantics reference (bf16 operand rounding)
    ref_f32 = reference_forward_f32(state, action, params)
    assert jnp.allclose(out, ref_f32, atol=5e-2, rtol=5e-2)

    print("KERNEL_OK")
</pallas_src>

<mosaic_0001>
module attributes {stable_mosaic.version = 11 : i64} {
  func.func @_critic_kernel(%arg0: memref<8x12xf32, #tpu.memory_space<vmem>>, %arg1: memref<8x4xf32, #tpu.memory_space<vmem>>, %arg2: memref<144x64xbf16, #tpu.memory_space<vmem>>, %arg3: memref<3x64xf32, #tpu.memory_space<vmem>>, %arg4: memref<8x1xf32, #tpu.memory_space<vmem>>) attributes {dimension_semantics = [], scalar_prefetch = 0 : i64, scratch_operands = 0 : i64, tpu.core_type = #tpu.core_type<tc>} {
    %c0 = arith.constant 0 : index
    %c0_0 = arith.constant 0 : index
    %0 = vector.load %arg2[%c0, %c0_0] : memref<144x64xbf16, #tpu.memory_space<vmem>>, vector<12x64xbf16>
    %c12 = arith.constant 12 : index
    %c0_1 = arith.constant 0 : index
    %1 = vector.load %arg2[%c12, %c0_1] : memref<144x64xbf16, #tpu.memory_space<vmem>>, vector<4x64xbf16>
    %c16 = arith.constant 16 : index
    %c0_2 = arith.constant 0 : index
    %2 = vector.load %arg2[%c16, %c0_2] : memref<144x64xbf16, #tpu.memory_space<vmem>>, vector<64x64xbf16>
    %c80 = arith.constant 80 : index
    %c0_3 = arith.constant 0 : index
    %3 = vector.load %arg2[%c80, %c0_3] : memref<144x64xbf16, #tpu.memory_space<vmem>>, vector<64x64xbf16>
    %c0_4 = arith.constant 0 : index
    %c0_5 = arith.constant 0 : index
    %4 = vector.load %arg3[%c0_4, %c0_5] : memref<3x64xf32, #tpu.memory_space<vmem>>, vector<3x64xf32>
    %5 = vector.extract_strided_slice %4 {offsets = [0, 0], sizes = [1, 64], strides = [1, 1]} : vector<3x64xf32> to vector<1x64xf32>
    %6 = vector.extract_strided_slice %4 {offsets = [1, 0], sizes = [1, 64], strides = [1, 1]} : vector<3x64xf32> to vector<1x64xf32>
    %7 = vector.extract_strided_slice %4 {offsets = [2, 0], sizes = [1, 64], strides = [1, 1]} : vector<3x64xf32> to vector<1x64xf32>
    %c0_6 = arith.constant 0 : index
    %c0_7 = arith.constant 0 : index
    %8 = vector.load %arg0[%c0_6, %c0_7] : memref<8x12xf32, #tpu.memory_space<vmem>>, vector<8x12xf32>
    %9 = arith.truncf %8 : vector<8x12xf32> to vector<8x12xbf16>
    %c0_8 = arith.constant 0 : index
    %c0_9 = arith.constant 0 : index
    %10 = vector.load %arg1[%c0_8, %c0_9] : memref<8x4xf32, #tpu.memory_space<vmem>>, vector<8x4xf32>
    %11 = arith.truncf %10 : vector<8x4xf32> to vector<8x4xbf16>
    %cst = arith.constant dense<0.000000e+00> : vector<8x64xf32>
    %12 = tpu.matmul %9, %0, %cst {dimension_numbers = #tpu.dot_dimension_numbers<[1], [0], [0], [1], [0, 0, 1, 1], [], []>} : vector<8x12xbf16>, vector<12x64xbf16>, vector<8x64xf32> -> vector<8x64xf32>
    %cst_10 = arith.constant dense<0.000000e+00> : vector<8x64xf32>
    %13 = tpu.matmul %11, %1, %cst_10 {dimension_numbers = #tpu.dot_dimension_numbers<[1], [0], [0], [1], [0, 0, 1, 1], [], []>} : vector<8x4xbf16>, vector<4x64xbf16>, vector<8x64xf32> -> vector<8x64xf32>
    %14 = arith.addf %12, %13 : vector<8x64xf32>
    %15 = vector.broadcast %5 : vector<1x64xf32> to vector<8x64xf32>
    %16 = arith.addf %14, %15 : vector<8x64xf32>
    %cst_11 = arith.constant 0.000000e+00 : f32
    %17 = vector.broadcast %cst_11 : f32 to vector<8x64xf32>
    %18 = arith.maximumf %16, %17 : vector<8x64xf32>
    %19 = arith.truncf %18 : vector<8x64xf32> to vector<8x64xbf16>
    %cst_12 = arith.constant dense<0.000000e+00> : vector<8x64xf32>
    %20 = tpu.matmul %19, %2, %cst_12 {dimension_numbers = #tpu.dot_dimension_numbers<[1], [0], [0], [1], [0, 0, 1, 1], [], []>} : vector<8x64xbf16>, vector<64x64xbf16>, vector<8x64xf32> -> vector<8x64xf32>
    %21 = vector.broadcast %6 : vector<1x64xf32> to vector<8x64xf32>
    %22 = arith.addf %20, %21 : vector<8x64xf32>
    %cst_13 = arith.constant 0.000000e+00 : f32
    %23 = vector.broadcast %cst_13 : f32 to vector<8x64xf32>
    %24 = arith.maximumf %22, %23 : vector<8x64xf32>
    %25 = arith.truncf %24 : vector<8x64xf32> to vector<8x64xbf16>
    %cst_14 = arith.constant dense<0.000000e+00> : vector<8x64xf32>
    %26 = tpu.matmul %25, %3, %cst_14 {dimension_numbers = #tpu.dot_dimension_numbers<[1], [0], [0], [1], [0, 0, 1, 1], [], []>} : vector<8x64xbf16>, vector<64x64xbf16>, vector<8x64xf32> -> vector<8x64xf32>
    %27 = vector.broadcast %7 : vector<1x64xf32> to vector<8x64xf32>
    %28 = arith.addf %26, %27 : vector<8x64xf32>
    %29 = vector.extract_strided_slice %28 {offsets = [0, 0], sizes = [8, 1], strides = [1, 1]} : vector<8x64xf32> to vector<8x1xf32>
    %30 = vector.extract_strided_slice %28 {offsets = [0, 1], sizes = [8, 1], strides = [1, 1]} : vector<8x64xf32> to vector<8x1xf32>
    %31 = arith.minimumf %29, %30 : vector<8x1xf32>
    %c0_15 = arith.constant 0 : index
    %c0_16 = arith.constant 0 : index
    %32 = vector.load %arg4[%c0_15, %c0_16] : memref<8x1xf32, #tpu.memory_space<vmem>>, vector<8x1xf32>
    tpu.vector_store %arg4[%c0_15, %c0_16], %31 {strides = array<i32>} : memref<8x1xf32, #tpu.memory_space<vmem>>, vector<8x1xf32>,
    return
  }
}

</mosaic_0001>

<llo_original>
// kernel: tpu_custom_call.1
$region0: #{tpu_custom_call.1}
  #allocation0 [shape = 'u32[]', space=smem, size = 0x4, offset = 0x4, fixed_abs, tag = 'smem constant byte address 0x4 - core index']
  #allocation1 [shape = 'u32[144,128]{1,0:T(1,128)}', space=vmem, size = 0x12000, scoped, tag = 'internal scratch']
  %s0 = inlined_call_operand.vmem [shape: f32[8,12], index: 0, kind: input, shape index: {}]
  %s1 = inlined_call_operand.vmem [shape: f32[8,4], index: 1, kind: input, shape index: {}]
  %s2 = inlined_call_operand.vmem [shape: bf16[144,64], index: 2, kind: input, shape index: {}]
  %s3 = inlined_call_operand.vmem [shape: f32[3,64], index: 3, kind: input, shape index: {}]
  %s4 = inlined_call_operand.vmem [shape: f32[8,1], index: 4, kind: output, shape index: {}]
  %s5 = sld [smem:[#allocation0]]
  $region26: #{tpu_custom_call.1} parent=0
    _
  %s7 = ssub.s32 1, %s5
  %s8 = scalar_select 0, %s7, %s5
  // Predicated region
  $region2: #{tpu_custom_call.1} parent=0 // pred_check
    _
  $region3: #{tpu_custom_call.1} parent=0 // pred_check_branch
    %10 = sbr.rel (0) target = $region5
  $region4: #{tpu_custom_call.1} parent=0 // pred_region
    _
  $region5: #{tpu_custom_call.1} parent=0 // pred_fallthru
    _
  // Predicated region
  $region6: #{tpu_custom_call.1} parent=0 // pred_check
    _
  $region7: #{tpu_custom_call.1} parent=0 // pred_check_branch
    %12 = sbr.rel (0) target = $region9
  $region8: #{tpu_custom_call.1} parent=0 // pred_region
    _
  $region9: #{tpu_custom_call.1} parent=0 // pred_fallthru
    _
  // Predicated region
  $region10: #{tpu_custom_call.1} parent=0 // pred_check
    _
  $region11: #{tpu_custom_call.1} parent=0 // pred_check_branch
    %14 = sbr.rel (0) target = $region13
  $region12: #{tpu_custom_call.1} parent=0 // pred_region
    _
  $region13: #{tpu_custom_call.1} parent=0 // pred_fallthru
    _
  // Predicated region
  $region14: #{tpu_custom_call.1} parent=0 // pred_check
    _
  $region15: #{tpu_custom_call.1} parent=0 // pred_check_branch
    %16 = sbr.rel (0) target = $region17
  $region16: #{tpu_custom_call.1} parent=0 // pred_region
    _
  $region17: #{tpu_custom_call.1} parent=0 // pred_fallthru
    _
  %v18 = vld [vmem:[%s2] sm:$0xf]
  %v19 = vld [vmem:[%s2 + $0x4] sm:$0x3]
  %v20 = vld [vmem:[%s2 + $0x4] sm:$0xc]
  %v21 = vld [vmem:[%s2 + $0x8] sm:$0xf]
  %v22 = vld [vmem:[%s2 + $0xc] sm:$0xf]
  %v23 = vld [vmem:[%s2 + $0x10] sm:$0xf]
  %v24 = vld [vmem:[%s2 + $0x14] sm:$0xf]
  %v25 = vld [vmem:[%s2 + $0x18] sm:$0xf]
  %v26 = vld [vmem:[%s2 + $0x1c] sm:$0xf]
  %v27 = vld [vmem:[%s2 + $0x20] sm:$0xf]
  %v28 = vld [vmem:[%s2 + $0x24] sm:$0xf]
  %v29 = vld [vmem:[%s2 + $0x28] sm:$0xf]
  %v30 = vld [vmem:[%s2 + $0x2c] sm:$0xf]
  %v31 = vld [vmem:[%s2 + $0x30] sm:$0xf]
  %v32 = vld [vmem:[%s2 + $0x34] sm:$0xf]
  %v33 = vld [vmem:[%s2 + $0x38] sm:$0xf]
  %v34 = vld [vmem:[%s2 + $0x3c] sm:$0xf]
  %v35 = vld [vmem:[%s2 + $0x40] sm:$0xf]
  %v36 = vld [vmem:[%s2 + $0x44] sm:$0xf]
  %v37 = vld [vmem:[%s3] sm:$0x7]
  %v38 = vld [vmem:[%s0] sm:$0xff]
  %v39 = vpack.c.bf16 %v38, %v38
  %v40 = vld [vmem:[%s1] sm:$0xff]
  %v41 = vpack.c.bf16 %v40, %v40
  %v43 = vunpack.c.l.b16 %v20
  %v44 = vpack.c.b16 %v43, %v43
  %v45 = vrot.slane %v44, 2
  %vm46 = vcmask 31744
  %v48 = vsel %vm46, %v41, 0
  %vm50 = vcmask 1041408
  %v52 = vsel %vm50, %v45, 0
  %54 = vmatprep.subr.bf16.mxu0 0
  %55 = vmatpush1.bf16.msra.mxu0 %v52
  %56 = vmatprep.subr.bf16.mxu0 0
  %57 = vmatpush1.bf16.msra.mxu0 0
  %58 = vmatprep.subr.bf16.mxu0 0
  %59 = vmatpush1.bf16.msra.mxu0 0
  %60 = vmatprep.subr.bf16.mxu0 0
  %61 = vmatpush1.bf16.msra.mxu0 0
  %62 = vmatprep.subr.bf16.mxu0 0
  %63 = vmatpush1.bf16.msra.mxu0 0
  %64 = vmatprep.subr.bf16.mxu0 0
  %65 = vmatpush1.bf16.msra.mxu0 0
  %66 = vmatprep.subr.bf16.mxu0 0
  %67 = vmatpush1.bf16.msra.mxu0 0
  %68 = vmatprep.subr.bf16.mxu0 0
  %69 = vmatpush1.bf16.msra.mxu0 0
  %70 = vmatprep.subr.bf16.mxu0 0
  %71 = vmatpush1.bf16.msra.mxu0 0
  %72 = vmatprep.subr.bf16.mxu0 0
  %73 = vmatpush1.bf16.msra.mxu0 0
  %74 = vmatprep.subr.bf16.mxu0 0
  %75 = vmatpush1.bf16.msra.mxu0 0
  %76 = vmatprep.subr.bf16.mxu0 0
  %77 = vmatpush1.bf16.msra.mxu0 0
  %78 = vmatprep.subr.bf16.mxu0 0
  %79 = vmatpush1.bf16.msra.mxu0 0
  %80 = vmatprep.subr.bf16.mxu0 0
  %81 = vmatpush1.bf16.msra.mxu0 0
  %82 = vmatprep.subr.bf16.mxu0 0
  %83 = vmatpush1.bf16.msra.mxu0 0
  %84 = vmatprep.subr.bf16.mxu0 0
  %85 = vmatpush1.bf16.msra.mxu0 0
  %86 = vmatprep.mubr.bf16.mxu0 0
  %87 = vmatmul.mubr.bf16.gmra.mrb[0].mxu0 %v48
  %v88 = vpop.f32.mrb[0].mxu0
  %v89 = vadd.f32 0.0, %v88
  %v90 = vpop.f32.mrb[0].mxu0
  %v91 = vpop.f32.mrb[0].mxu0
  %v92 = vpop.f32.mrb[0].mxu0
  %93 = vdwg.mxu0
  %v96 = vunpack.c.l.b16 %v18
  %v97 = vunpack.c.l.b16 %v19
  %v98 = vpack.c.b16 %v97, %v96
  %vm99 = vcmask 97280
  %v101 = vsel %vm99, %v39, 0
  %vm103 = vcmask 1045504
  %v105 = vsel %vm103, %v98, 0
  %107 = vmatprep.subr.bf16.mxu0 0
  %108 = vmatpush1.bf16.msra.mxu0 %v105
  %109 = vmatprep.subr.bf16.mxu0 0
  %110 = vmatpush1.bf16.msra.mxu0 0
  %111 = vmatprep.subr.bf16.mxu0 0
  %112 = vmatpush1.bf16.msra.mxu0 0
  %113 = vmatprep.subr.bf16.mxu0 0
  %114 = vmatpush1.bf16.msra.mxu0 0
  %115 = vmatprep.subr.bf16.mxu0 0
  %116 = vmatpush1.bf16.msra.mxu0 0
  %117 = vmatprep.subr.bf16.mxu0 0
  %118 = vmatpush1.bf16.msra.mxu0 0
  %119 = vmatprep.subr.bf16.mxu0 0
  %120 = vmatpush1.bf16.msra.mxu0 0
  %121 = vmatprep.subr.bf16.mxu0 0
  %122 = vmatpush1.bf16.msra.mxu0 0
  %123 = vmatprep.subr.bf16.mxu0 0
  %124 = vmatpush1.bf16.msra.mxu0 0
  %125 = vmatprep.subr.bf16.mxu0 0
  %126 = vmatpush1.bf16.msra.mxu0 0
  %127 = vmatprep.subr.bf16.mxu0 0
  %128 = vmatpush1.bf16.msra.mxu0 0
  %129 = vmatprep.subr.bf16.mxu0 0
  %130 = vmatpush1.bf16.msra.mxu0 0
  %131 = vmatprep.subr.bf16.mxu0 0
  %132 = vmatpush1.bf16.msra.mxu0 0
  %133 = vmatprep.subr.bf16.mxu0 0
  %134 = vmatpush1.bf16.msra.mxu0 0
  %135 = vmatprep.subr.bf16.mxu0 0
  %136 = vmatpush1.bf16.msra.mxu0 0
  %137 = vmatprep.subr.bf16.mxu0 0
  %138 = vmatpush1.bf16.msra.mxu0 0
  %139 = vmatprep.mubr.bf16.mxu0 0
  %140 = vmatmul.mubr.bf16.gmra.mrb[0].mxu0 %v101
  %v141 = vpop.f32.mrb[0].mxu0
  %v142 = vadd.f32 %v89, %v141
  %v143 = vpop.f32.mrb[0].mxu0
  %v144 = vpop.f32.mrb[0].mxu0
  %v145 = vpop.f32.mrb[0].mxu0
  %146 = vdwg.mxu0
  %v147 = vlaneseq
  %v148 = vshrl.u32 %v147, 7
  %v149 = vsub.s32 0, %v148
  %v150 = vrot.slane %v37, %v149
  %v151 = vadd.f32 %v142, %v150
  %v152 = vmax.f32 %v151, 0.0
  %v153 = vpack.c.bf16 %v152, %v152
  %v154 = vlaneseq
  %v155 = vshrl.u32 %v154, 7
  %v156 = vsub.s32 1, %v155
  %v157 = vrot.slane %v37, %v156
  %v166 = vunpack.c.l.b16 %v21
  %v167 = vunpack.c.l.b16 %v22
  %v168 = vunpack.c.l.b16 %v23
  %v169 = vunpack.c.l.b16 %v24
  %v170 = vunpack.c.l.b16 %v25
  %v171 = vunpack.c.l.b16 %v26
  %v172 = vunpack.c.l.b16 %v27
  %v173 = vunpack.c.l.b16 %v28
  %v174 = vpack.c.b16 %v167, %v166
  %v175 = vpack.c.b16 %v169, %v168
  %v176 = vpack.c.b16 %v171, %v170
  %v177 = vpack.c.b16 %v173, %v172
  %vm182 = vcmask 523264
  %v184 = vsel %vm182, %v153, 0
  %186 = vmatprep.subr.bf16.mxu0 0
  %187 = vmatpush1.bf16.msra.mxu0 %v174
  %188 = vmatprep.subr.bf16.mxu0 0
  %189 = vmatpush1.bf16.msra.mxu0 %v175
  %190 = vmatprep.subr.bf16.mxu0 0
  %191 = vmatpush1.bf16.msra.mxu0 %v176
  %192 = vmatprep.subr.bf16.mxu0 0
  %193 = vmatpush1.bf16.msra.mxu0 %v177
  %194 = vmatprep.subr.bf16.mxu0 0
  %195 = vmatpush1.bf16.msra.mxu0 0
  %196 = vmatprep.subr.bf16.mxu0 0
  %197 = vmatpush1.bf16.msra.mxu0 0
  %198 = vmatprep.subr.bf16.mxu0 0
  %199 = vmatpush1.bf16.msra.mxu0 0
  %200 = vmatprep.subr.bf16.mxu0 0
  %201 = vmatpush1.bf16.msra.mxu0 0
  %202 = vmatprep.subr.bf16.mxu0 0
  %203 = vmatpush1.bf16.msra.mxu0 0
  %204 = vmatprep.subr.bf16.mxu0 0
  %205 = vmatpush1.bf16.msra.mxu0 0
  %206 = vmatprep.subr.bf16.mxu0 0
  %207 = vmatpush1.bf16.msra.mxu0 0
  %208 = vmatprep.subr.bf16.mxu0 0
  %209 = vmatpush1.bf16.msra.mxu0 0
  %210 = vmatprep.subr.bf16.mxu0 0
  %211 = vmatpush1.bf16.msra.mxu0 0
  %212 = vmatprep.subr.bf16.mxu0 0
  %213 = vmatpush1.bf16.msra.mxu0 0
  %214 = vmatprep.subr.bf16.mxu0 0
  %215 = vmatpush1.bf16.msra.mxu0 0
  %216 = vmatprep.subr.bf16.mxu0 0
  %217 = vmatpush1.bf16.msra.mxu0 0
  %218 = vmatprep.mubr.bf16.mxu0 0
  %219 = vmatmul.mubr.bf16.gmra.mrb[0].mxu0 %v184
  %v220 = vpop.f32.mrb[0].mxu0
  %v221 = vadd.f32 %v157, %v220
  %v222 = vpop.f32.mrb[0].mxu0
  %v223 = vpop.f32.mrb[0].mxu0
  %v224 = vpop.f32.mrb[0].mxu0
  %225 = vdwg.mxu0
  %v226 = vmax.f32 %v221, 0.0
  %v227 = vpack.c.bf16 %v226, %v226
  %v228 = vlaneseq
  %v229 = vshrl.u32 %v228, 7
  %v230 = vsub.s32 2, %v229
  %v231 = vrot.slane %v37, %v230
  %v240 = vunpack.c.l.b16 %v29
  %v241 = vunpack.c.l.b16 %v30
  %v242 = vunpack.c.l.b16 %v31
  %v243 = vunpack.c.l.b16 %v32
  %v244 = vunpack.c.l.b16 %v33
  %v245 = vunpack.c.l.b16 %v34
  %v246 = vunpack.c.l.b16 %v35
  %v247 = vunpack.c.l.b16 %v36
  %v248 = vpack.c.b16 %v241, %v240
  %v249 = vpack.c.b16 %v243, %v242
  %v250 = vpack.c.b16 %v245, %v244
  %v251 = vpack.c.b16 %v247, %v246
  %v257 = vsel %vm182, %v227, 0
  %259 = vmatprep.subr.bf16.mxu0 0
  %260 = vmatpush1.bf16.msra.mxu0 %v248
  %261 = vmatprep.subr.bf16.mxu0 0
  %262 = vmatpush1.bf16.msra.mxu0 %v249
  %263 = vmatprep.subr.bf16.mxu0 0
  %264 = vmatpush1.bf16.msra.mxu0 %v250
  %265 = vmatprep.subr.bf16.mxu0 0
  %266 = vmatpush1.bf16.msra.mxu0 %v251
  %267 = vmatprep.subr.bf16.mxu0 0
  %268 = vmatpush1.bf16.msra.mxu0 0
  %269 = vmatprep.subr.bf16.mxu0 0
  %270 = vmatpush1.bf16.msra.mxu0 0
  %271 = vmatprep.subr.bf16.mxu0 0
  %272 = vmatpush1.bf16.msra.mxu0 0
  %273 = vmatprep.subr.bf16.mxu0 0
  %274 = vmatpush1.bf16.msra.mxu0 0
  %275 = vmatprep.subr.bf16.mxu0 0
  %276 = vmatpush1.bf16.msra.mxu0 0
  %277 = vmatprep.subr.bf16.mxu0 0
  %278 = vmatpush1.bf16.msra.mxu0 0
  %279 = vmatprep.subr.bf16.mxu0 0
  %280 = vmatpush1.bf16.msra.mxu0 0
  %281 = vmatprep.subr.bf16.mxu0 0
  %282 = vmatpush1.bf16.msra.mxu0 0
  %283 = vmatprep.subr.bf16.mxu0 0
  %284 = vmatpush1.bf16.msra.mxu0 0
  %285 = vmatprep.subr.bf16.mxu0 0
  %286 = vmatpush1.bf16.msra.mxu0 0
  %287 = vmatprep.subr.bf16.mxu0 0
  %288 = vmatpush1.bf16.msra.mxu0 0
  %289 = vmatprep.subr.bf16.mxu0 0
  %290 = vmatpush1.bf16.msra.mxu0 0
  %291 = vmatprep.mubr.bf16.mxu0 0
  %292 = vmatmul.mubr.bf16.gmra.mrb[0].mxu0 %v257
  %v293 = vpop.f32.mrb[0].mxu0
  %v294 = vadd.f32 %v231, %v293
  %v295 = vpop.f32.mrb[0].mxu0
  %v296 = vpop.f32.mrb[0].mxu0
  %v297 = vpop.f32.mrb[0].mxu0
  %298 = vdwg.mxu0
  %300 = vrot.lane.b32.xlu0 %v294, 127
  %v301 = vpop.permute.xlu0 %300
  %v303 = vmin.f32 %v294, %v301
  %vm304 = vcmask 7168
  %305 = vst.msk [vmem:[%s4] sm:$0xff] %vm304, %v303
  // Predicated region
  $region18: #{tpu_custom_call.1} parent=0 // pred_check
    _
  $region19: #{tpu_custom_call.1} parent=0 // pred_check_branch
    %307 = sbr.rel (0) target = $region21
  $region20: #{tpu_custom_call.1} parent=0 // pred_region
    _
  $region21: #{tpu_custom_call.1} parent=0 // pred_fallthru
    _
  // Predicated region
  $region22: #{tpu_custom_call.1} parent=0 // pred_check
    _
  $region23: #{tpu_custom_call.1} parent=0 // pred_check_branch
    %309 = sbr.rel (0) target = $region25
  $region24: #{tpu_custom_call.1} parent=0 // pred_region
    _
  $region25: #{tpu_custom_call.1} parent=0 // pred_fallthru
    _

</llo_original>
